<compile_context>
chip_gen: v5e
topology: v5e:2x2
jax: 0.10.0
libtpu: 0.0.40
codegen_flags: <defaults>
</compile_context>

<pallas_src>
import jax
import jax.numpy as jnp
from jax import lax
from jax.experimental import pallas as pl
from jax.experimental.pallas import tpu as pltpu

# Model hyperparameters (from the PyTorch source)
N_EMBD = 32
BLOCK_SIZE = 16
N_BLOCKS = 2
N_HEADS = 2
HEAD_SIZE = N_EMBD // N_HEADS
LN_EPS = 1e-5
MASK_NEG = -1e30


def _layernorm(z, g, b):
    mu = jnp.mean(z, axis=-1, keepdims=True)
    var = jnp.mean((z - mu) ** 2, axis=-1, keepdims=True)
    return (z - mu) * lax.rsqrt(var + LN_EPS) * g + b


def block_kernel(x_ref, vec_ref, tb_ref, w_ref, w2_ref, o_ref):
    R, C = x_ref.shape
    T = BLOCK_SIZE
    H, hs = N_HEADS, HEAD_SIZE
    D3 = 3 * H * hs
    Bt = R // T

    # ---- unpack consolidated constant slabs (tiny slices, resident in VMEM) ----
    vecs = vec_ref[...]                      # (8, 4*C)
    ln1g, ln1b = vecs[0:1, :C], vecs[1:2, :C]
    bp = vecs[2:3, :C]
    ln2g, ln2b = vecs[3:4, :C], vecs[4:5, :C]
    b2 = vecs[5:6, :C]
    b1 = vecs[6:7, :]                        # (1, 4*C)

    tb = tb_ref[...]                         # (T, D3 + T)
    qkv_bias = tb[:, :D3]                    # (T, D3)  Q part pre-scaled
    mask_bias = tb[:, D3:D3 + T]             # (T, T)   0 / -1e30 additive causal

    w = w_ref[...]                           # (C, D3 + C + 4*C)
    wqkv = w[:, :D3]                         # (C, D3)  Q cols pre-scaled
    wp = w[:, D3:D3 + C]                     # (C, C)
    w1 = w[:, D3 + C:]                       # (C, 4*C)
    w2 = w2_ref[...]                         # (4*C, C)

    x = x_ref[...]                           # (R, C) f32

    # ---- LayerNorm 1 + fused QKV projection (single MXU push) ----
    xn = _layernorm(x, ln1g, ln1b)
    qkv = jnp.dot(xn, wqkv, preferred_element_type=jnp.float32)      # (R, D3)
    qkv = qkv.reshape(Bt, T, D3) + qkv_bias[None]                    # broadcast bias

    # ---- attention heads (batched over Bt); output proj as sum of partials ----
    sa = jnp.zeros((R, C), jnp.float32)
    for h in range(H):                                               # tiny static loop
        q = qkv[:, :, h * hs:(h + 1) * hs]                           # (Bt, T, hs)
        k = qkv[:, :, (H + h) * hs:(H + h + 1) * hs]
        v = qkv[:, :, (2 * H + h) * hs:(2 * H + h + 1) * hs]
        att = jnp.einsum('bqd,bkd->bqk', q, k,
                         preferred_element_type=jnp.float32)          # (Bt, T, T)
        att = att + mask_bias[None]
        att = att - jnp.max(att, axis=-1, keepdims=True)
        p = jnp.exp(att)
        p = p * pl.reciprocal(jnp.sum(p, axis=-1, keepdims=True), approx=False)
        ho = jnp.einsum('bqk,bkd->bqd', p, v,
                        preferred_element_type=jnp.float32)           # (Bt, T, hs)
        sa = sa + jnp.dot(ho.reshape(R, hs), wp[h * hs:(h + 1) * hs, :],
                          preferred_element_type=jnp.float32)         # (R, C)

    # ---- residual 1 (proj bias folded in) ----
    x1 = x + sa + bp

    # ---- LayerNorm 2 + FeedForward + residual 2 ----
    xn2 = _layernorm(x1, ln2g, ln2b)
    h1 = jnp.maximum(
        jnp.dot(xn2, w1, preferred_element_type=jnp.float32) + b1, 0.0)
    ff = jnp.dot(h1, w2, preferred_element_type=jnp.float32) + b2
    o_ref[...] = x1 + ff                                              # (R, C)


def _choose_bt(B):
    """Rows-per-step policy.

    Batched attention makes per-row cost linear in Bt, so bigger Bt is
    strictly better on single-TC chips (v5e/v6e): fewer ~600-cycle grid-step
    overheads and more MXU-M rows per push.  Only split into two grid blocks
    (one per v7x TensorCore) once B is large enough that the split costs
    nothing on 1-TC chips.
    """
    if B >= 16 and B % 2 == 0:
        return B // 2
    return B


def block_forward(x, params):
    (ln1_g, ln1_b, wq, wk, wv, lpos, gpos, wp, bp,
     ln2_g, ln2_b, w1, b1, w2, b2) = params
    B, T, C = x.shape
    H, _, hs = wq.shape
    D3 = 3 * H * hs
    assert C == N_EMBD and T == BLOCK_SIZE

    # --- wrapper-side layout plumbing (tiny arrays, done once per call) ---
    scale = hs ** -0.5
    # Fused QKV weight: columns = [Q h0..h{H-1} | K h0.. | V h0..]; scale folded into Q.
    wqkv = jnp.concatenate(
        [w.transpose(1, 0, 2).reshape(C, H * hs) for w in (wq * scale, wk, wv)], axis=1)
    # Fused additive positional bias for the QKV output -> (T, D3); scale folded into Q.
    qb = jnp.broadcast_to(scale * lpos[:, 0, :][:, None, :], (H, T, hs))
    kb = lpos[:, 1, :][:, None, :] + gpos
    vb = lpos[:, 2, :][:, None, :] + gpos
    qkv_bias = jnp.concatenate(
        [b.transpose(1, 0, 2).reshape(T, H * hs) for b in (qb, kb, vb)], axis=1)
    # Additive causal mask bias (0 on/below diagonal, -1e30 above).
    causal = jnp.tril(jnp.ones((T, T), bool))
    mask_bias = jnp.where(causal, 0.0, MASK_NEG).astype(jnp.float32)

    # Consolidated constant slabs (fewer DMA descriptors / double-buffers).
    vec_slab = jnp.zeros((8, 4 * C), jnp.float32)
    vec_slab = vec_slab.at[0, :C].set(ln1_g[0])
    vec_slab = vec_slab.at[1, :C].set(ln1_b[0])
    vec_slab = vec_slab.at[2, :C].set(bp[0])
    vec_slab = vec_slab.at[3, :C].set(ln2_g[0])
    vec_slab = vec_slab.at[4, :C].set(ln2_b[0])
    vec_slab = vec_slab.at[5, :C].set(b2[0])
    vec_slab = vec_slab.at[6, :].set(b1[0])

    tb_slab = jnp.zeros((T, D3 + T), jnp.float32)
    tb_slab = tb_slab.at[:, :D3].set(qkv_bias)
    tb_slab = tb_slab.at[:, D3:].set(mask_bias)

    w_slab = jnp.concatenate([wqkv, wp, w1], axis=1)   # (C, D3 + C + 4*C)

    Bt = _choose_bt(B)
    assert B % Bt == 0
    R = Bt * T
    grid = (B // Bt,)

    x2d = x.reshape(B * T, C)
    const2d = lambda shape: pl.BlockSpec(shape, lambda b: (0, 0))

    in_specs = [
        pl.BlockSpec((R, C), lambda b: (b, 0)),        # x rows
        const2d((8, 4 * C)),                           # ln/bias vector slab
        const2d((T, D3 + T)),                          # qkv pos-bias + causal mask
        const2d((C, D3 + C + 4 * C)),                  # [wqkv | wp | w1]
        const2d((4 * C, C)),                           # w2
    ]

    out2d = pl.pallas_call(
        block_kernel,
        out_shape=jax.ShapeDtypeStruct((B * T, C), jnp.float32),
        grid_spec=pltpu.PrefetchScalarGridSpec(
            num_scalar_prefetch=0,
            grid=grid,
            in_specs=in_specs,
            out_specs=pl.BlockSpec((R, C), lambda b: (b, 0)),
        ),
        compiler_params=pltpu.CompilerParams(
            dimension_semantics=("parallel",)),
    )(x2d, vec_slab, tb_slab, w_slab, w2)
    return out2d.reshape(B, T, C)


def make_params(key):
    ks = jax.random.split(key, 12)
    pos_std = 0.02 * (N_BLOCKS * N_HEADS) ** (-0.5)
    p = dict(
        ln1_g=jnp.ones((1, N_EMBD), jnp.float32),
        ln1_b=jnp.zeros((1, N_EMBD), jnp.float32),
        wq=0.02 * jax.random.normal(ks[0], (N_HEADS, N_EMBD, HEAD_SIZE), jnp.float32),
        wk=0.02 * jax.random.normal(ks[1], (N_HEADS, N_EMBD, HEAD_SIZE), jnp.float32),
        wv=0.02 * jax.random.normal(ks[2], (N_HEADS, N_EMBD, HEAD_SIZE), jnp.float32),
        lpos=pos_std * jax.random.normal(ks[3], (N_HEADS, 3, HEAD_SIZE), jnp.float32),
        gpos=pos_std * jax.random.normal(ks[4], (N_HEADS, BLOCK_SIZE, HEAD_SIZE), jnp.float32),
        wp=0.02 * jax.random.normal(ks[5], (N_EMBD, N_EMBD), jnp.float32),
        bp=0.01 * jax.random.normal(ks[6], (1, N_EMBD), jnp.float32),
        ln2_g=jnp.ones((1, N_EMBD), jnp.float32),
        ln2_b=jnp.zeros((1, N_EMBD), jnp.float32),
        w1=0.02 * jax.random.normal(ks[7], (N_EMBD, 4 * N_EMBD), jnp.float32),
        b1=0.01 * jax.random.normal(ks[8], (1, 4 * N_EMBD), jnp.float32),
        w2=0.02 * jax.random.normal(ks[9], (4 * N_EMBD, N_EMBD), jnp.float32),
        b2=0.01 * jax.random.normal(ks[10], (1, N_EMBD), jnp.float32),
    )
    order = ("ln1_g", "ln1_b", "wq", "wk", "wv", "lpos", "gpos", "wp", "bp",
             "ln2_g", "ln2_b", "w1", "b1", "w2", "b2")
    return tuple(p[k] for k in order)


def block_forward_ref(x, params):
    """Pure-JAX reference for correctness checking."""
    (ln1_g, ln1_b, wq, wk, wv, lpos, gpos, wp, bp,
     ln2_g, ln2_b, w1, b1, w2, b2) = params

    def ln(z, g, b):
        mu = jnp.mean(z, axis=-1, keepdims=True)
        var = jnp.mean((z - mu) ** 2, axis=-1, keepdims=True)
        return (z - mu) / jnp.sqrt(var + LN_EPS) * g + b

    xn = ln(x, ln1_g, ln1_b)
    T = x.shape[1]
    causal = jnp.tril(jnp.ones((T, T), bool))
    heads = []
    for h in range(N_HEADS):
        q = xn @ wq[h] + lpos[h, 0][None, None, :]
        k = xn @ wk[h] + lpos[h, 1][None, None, :] + gpos[h][None, :, :]
        v = xn @ wv[h] + lpos[h, 2][None, None, :] + gpos[h][None, :, :]
        att = (q @ jnp.swapaxes(k, -1, -2)) * HEAD_SIZE ** -0.5
        att = jnp.where(causal, att, -jnp.inf)
        att = jax.nn.softmax(att, axis=-1)
        heads.append(att @ v)
    sa = jnp.concatenate(heads, axis=-1) @ wp + bp
    x1 = x + sa
    xn2 = ln(x1, ln2_g, ln2_b)
    ff = jnp.maximum(xn2 @ w1 + b1, 0.0) @ w2 + b2
    return x1 + ff


if __name__ == "__main__":
    key = jax.random.PRNGKey(0)
    k_x, k_p = jax.random.split(key)
    B = 2
    x = jax.random.normal(k_x, (B, BLOCK_SIZE, N_EMBD), jnp.float32)
    params = make_params(k_p)

    out = jax.block_until_ready(block_forward(x, params))
    ref = block_forward_ref(x, params)
    assert out.shape == (B, BLOCK_SIZE, N_EMBD)
    assert jnp.allclose(out, ref, atol=1e-4, rtol=1e-4)
    print("KERNEL_OK")
</pallas_src>

<mosaic_0001>
module attributes {stable_mosaic.version = 11 : i64} {
  func.func @block_kernel(%arg0: i32, %arg1: memref<32x32xf32, #tpu.memory_space<vmem>>, %arg2: memref<8x128xf32, #tpu.memory_space<vmem>>, %arg3: memref<16x112xf32, #tpu.memory_space<vmem>>, %arg4: memref<32x256xf32, #tpu.memory_space<vmem>>, %arg5: memref<128x32xf32, #tpu.memory_space<vmem>>, %arg6: memref<32x32xf32, #tpu.memory_space<vmem>>) attributes {dimension_semantics = [#tpu.dimension_semantics<parallel>], iteration_bounds = array<i64: 1>, scalar_prefetch = 0 : i64, scratch_operands = 0 : i64, tpu.core_type = #tpu.core_type<tc>, window_params = [{transform_indices = @transform_0, window_bounds = array<i64: 32, 32>}, {pipeline_mode = #tpu.pipeline_mode<synchronous>, transform_indices = @transform_1, window_bounds = array<i64: 8, 128>}, {pipeline_mode = #tpu.pipeline_mode<synchronous>, transform_indices = @transform_2, window_bounds = array<i64: 16, 112>}, {pipeline_mode = #tpu.pipeline_mode<synchronous>, transform_indices = @transform_3, window_bounds = array<i64: 32, 256>}, {pipeline_mode = #tpu.pipeline_mode<synchronous>, transform_indices = @transform_4, window_bounds = array<i64: 128, 32>}, {transform_indices = @transform_5, window_bounds = array<i64: 32, 32>}]} {
    %c0 = arith.constant 0 : index
    %c0_0 = arith.constant 0 : index
    %0 = vector.load %arg2[%c0, %c0_0] : memref<8x128xf32, #tpu.memory_space<vmem>>, vector<8x128xf32>
    %1 = vector.extract_strided_slice %0 {offsets = [0, 0], sizes = [1, 32], strides = [1, 1]} : vector<8x128xf32> to vector<1x32xf32>
    %2 = vector.extract_strided_slice %0 {offsets = [1, 0], sizes = [1, 32], strides = [1, 1]} : vector<8x128xf32> to vector<1x32xf32>
    %3 = vector.extract_strided_slice %0 {offsets = [2, 0], sizes = [1, 32], strides = [1, 1]} : vector<8x128xf32> to vector<1x32xf32>
    %4 = vector.extract_strided_slice %0 {offsets = [3, 0], sizes = [1, 32], strides = [1, 1]} : vector<8x128xf32> to vector<1x32xf32>
    %5 = vector.extract_strided_slice %0 {offsets = [4, 0], sizes = [1, 32], strides = [1, 1]} : vector<8x128xf32> to vector<1x32xf32>
    %6 = vector.extract_strided_slice %0 {offsets = [5, 0], sizes = [1, 32], strides = [1, 1]} : vector<8x128xf32> to vector<1x32xf32>
    %7 = vector.extract_strided_slice %0 {offsets = [6, 0], sizes = [1, 128], strides = [1, 1]} : vector<8x128xf32> to vector<1x128xf32>
    %c0_1 = arith.constant 0 : index
    %c0_2 = arith.constant 0 : index
    %8 = vector.load %arg3[%c0_1, %c0_2] : memref<16x112xf32, #tpu.memory_space<vmem>>, vector<16x112xf32>
    %9 = vector.extract_strided_slice %8 {offsets = [0, 0], sizes = [16, 96], strides = [1, 1]} : vector<16x112xf32> to vector<16x96xf32>
    %10 = vector.extract_strided_slice %8 {offsets = [0, 96], sizes = [16, 16], strides = [1, 1]} : vector<16x112xf32> to vector<16x16xf32>
    %c0_3 = arith.constant 0 : index
    %c0_4 = arith.constant 0 : index
    %11 = vector.load %arg4[%c0_3, %c0_4] : memref<32x256xf32, #tpu.memory_space<vmem>>, vector<32x256xf32>
    %12 = vector.extract_strided_slice %11 {offsets = [0, 0], sizes = [32, 96], strides = [1, 1]} : vector<32x256xf32> to vector<32x96xf32>
    %13 = vector.extract_strided_slice %11 {offsets = [0, 96], sizes = [32, 32], strides = [1, 1]} : vector<32x256xf32> to vector<32x32xf32>
    %14 = vector.extract_strided_slice %11 {offsets = [0, 128], sizes = [32, 128], strides = [1, 1]} : vector<32x256xf32> to vector<32x128xf32>
    %c0_5 = arith.constant 0 : index
    %c0_6 = arith.constant 0 : index
    %15 = vector.load %arg5[%c0_5, %c0_6] : memref<128x32xf32, #tpu.memory_space<vmem>>, vector<128x32xf32>
    %c0_7 = arith.constant 0 : index
    %c0_8 = arith.constant 0 : index
    %16 = vector.load %arg1[%c0_7, %c0_8] : memref<32x32xf32, #tpu.memory_space<vmem>>, vector<32x32xf32>
    %cst = arith.constant dense<0.000000e+00> : vector<32xf32>
    %17 = vector.multi_reduction <add>, %16, %cst [1] : vector<32x32xf32> to vector<32xf32>
    %18 = vector.shape_cast %17 : vector<32xf32> to vector<32x1xf32>
    %cst_9 = arith.constant 3.200000e+01 : f32
    %19 = vector.broadcast %cst_9 : f32 to vector<32x1xf32>
    %20 = arith.divf %18, %19 : vector<32x1xf32>
    %21 = vector.broadcast %20 : vector<32x1xf32> to vector<32x32xf32>
    %22 = arith.subf %16, %21 : vector<32x32xf32>
    %23 = arith.mulf %22, %22 : vector<32x32xf32>
    %cst_10 = arith.constant dense<0.000000e+00> : vector<32xf32>
    %24 = vector.multi_reduction <add>, %23, %cst_10 [1] : vector<32x32xf32> to vector<32xf32>
    %25 = vector.shape_cast %24 : vector<32xf32> to vector<32x1xf32>
    %cst_11 = arith.constant 3.200000e+01 : f32
    %26 = vector.broadcast %cst_11 : f32 to vector<32x1xf32>
    %27 = arith.divf %25, %26 : vector<32x1xf32>
    %28 = vector.broadcast %20 : vector<32x1xf32> to vector<32x32xf32>
    %29 = arith.subf %16, %28 : vector<32x32xf32>
    %cst_12 = arith.constant 9.99999974E-6 : f32
    %30 = vector.broadcast %cst_12 : f32 to vector<32x1xf32>
    %31 = arith.addf %27, %30 : vector<32x1xf32>
    %32 = math.rsqrt %31 : vector<32x1xf32>
    %33 = vector.broadcast %32 : vector<32x1xf32> to vector<32x32xf32>
    %34 = arith.mulf %29, %33 : vector<32x32xf32>
    %35 = vector.broadcast %1 : vector<1x32xf32> to vector<32x32xf32>
    %36 = arith.mulf %34, %35 : vector<32x32xf32>
    %37 = vector.broadcast %2 : vector<1x32xf32> to vector<32x32xf32>
    %38 = arith.addf %36, %37 : vector<32x32xf32>
    %cst_13 = arith.constant dense<0.000000e+00> : vector<32x96xf32>
    %39 = tpu.matmul %38, %12, %cst_13 {dimension_numbers = #tpu.dot_dimension_numbers<[1], [0], [0], [1], [0, 0, 1, 1], [], []>} : vector<32x32xf32>, vector<32x96xf32>, vector<32x96xf32> -> vector<32x96xf32>
    %40 = vector.shape_cast %39 : vector<32x96xf32> to vector<2x16x96xf32>
    %41 = vector.shape_cast %9 : vector<16x96xf32> to vector<1x16x96xf32>
    %42 = vector.broadcast %41 : vector<1x16x96xf32> to vector<2x16x96xf32>
    %43 = arith.addf %40, %42 : vector<2x16x96xf32>
    %cst_14 = arith.constant 0.000000e+00 : f32
    %44 = vector.broadcast %cst_14 : f32 to vector<32x32xf32>
    %45 = vector.extract_strided_slice %43 {offsets = [0, 0, 0], sizes = [2, 16, 16], strides = [1, 1, 1]} : vector<2x16x96xf32> to vector<2x16x16xf32>
    %46 = vector.extract_strided_slice %43 {offsets = [0, 0, 32], sizes = [2, 16, 16], strides = [1, 1, 1]} : vector<2x16x96xf32> to vector<2x16x16xf32>
    %47 = vector.extract_strided_slice %43 {offsets = [0, 0, 64], sizes = [2, 16, 16], strides = [1, 1, 1]} : vector<2x16x96xf32> to vector<2x16x16xf32>
    "tpu.trace_start"() <{level = 10 : i32, message = "bqd,bkd->bqk"}> : () -> ()
    %cst_15 = arith.constant dense<0.000000e+00> : vector<2x16x16xf32>
    %48 = tpu.matmul %45, %46, %cst_15 {dimension_numbers = #tpu.dot_dimension_numbers<[2], [2], [1], [1], [0, 0, 0, 1, 1, 1], [0], [0]>} : vector<2x16x16xf32>, vector<2x16x16xf32>, vector<2x16x16xf32> -> vector<2x16x16xf32>
    "tpu.trace_stop"() : () -> ()
    %49 = vector.shape_cast %10 : vector<16x16xf32> to vector<1x16x16xf32>
    %50 = vector.broadcast %49 : vector<1x16x16xf32> to vector<2x16x16xf32>
    %51 = arith.addf %48, %50 : vector<2x16x16xf32>
    %cst_16 = arith.constant dense<0xFF800000> : vector<2x16xf32>
    %52 = vector.multi_reduction <maximumf>, %51, %cst_16 [2] : vector<2x16x16xf32> to vector<2x16xf32>
    %53 = vector.shape_cast %52 : vector<2x16xf32> to vector<2x16x1xf32>
    %54 = vector.broadcast %53 : vector<2x16x1xf32> to vector<2x16x16xf32>
    %55 = arith.subf %51, %54 : vector<2x16x16xf32>
    %56 = math.exp %55 : vector<2x16x16xf32>
    %cst_17 = arith.constant dense<0.000000e+00> : vector<2x16xf32>
    %57 = vector.multi_reduction <add>, %56, %cst_17 [2] : vector<2x16x16xf32> to vector<2x16xf32>
    %58 = vector.shape_cast %57 : vector<2x16xf32> to vector<2x16x1xf32>
    %59 = tpu.reciprocal %58 : vector<2x16x1xf32> -> vector<2x16x1xf32>
    %60 = vector.broadcast %59 : vector<2x16x1xf32> to vector<2x16x16xf32>
    %61 = arith.mulf %56, %60 : vector<2x16x16xf32>
    "tpu.trace_start"() <{level = 10 : i32, message = "bqk,bkd->bqd"}> : () -> ()
    %cst_18 = arith.constant dense<0.000000e+00> : vector<2x16x16xf32>
    %62 = tpu.matmul %61, %47, %cst_18 {dimension_numbers = #tpu.dot_dimension_numbers<[2], [1], [1], [2], [0, 0, 0, 1, 1, 2], [0], [0]>} : vector<2x16x16xf32>, vector<2x16x16xf32>, vector<2x16x16xf32> -> vector<2x16x16xf32>
    "tpu.trace_stop"() : () -> ()
    %63 = vector.shape_cast %62 : vector<2x16x16xf32> to vector<32x16xf32>
    %64 = vector.extract_strided_slice %13 {offsets = [0, 0], sizes = [16, 32], strides = [1, 1]} : vector<32x32xf32> to vector<16x32xf32>
    %cst_19 = arith.constant dense<0.000000e+00> : vector<32x32xf32>
    %65 = tpu.matmul %63, %64, %cst_19 {dimension_numbers = #tpu.dot_dimension_numbers<[1], [0], [0], [1], [0, 0, 1, 1], [], []>} : vector<32x16xf32>, vector<16x32xf32>, vector<32x32xf32> -> vector<32x32xf32>
    %66 = arith.addf %44, %65 : vector<32x32xf32>
    %67 = vector.extract_strided_slice %43 {offsets = [0, 0, 16], sizes = [2, 16, 16], strides = [1, 1, 1]} : vector<2x16x96xf32> to vector<2x16x16xf32>
    %68 = vector.extract_strided_slice %43 {offsets = [0, 0, 48], sizes = [2, 16, 16], strides = [1, 1, 1]} : vector<2x16x96xf32> to vector<2x16x16xf32>
    %69 = vector.extract_strided_slice %43 {offsets = [0, 0, 80], sizes = [2, 16, 16], strides = [1, 1, 1]} : vector<2x16x96xf32> to vector<2x16x16xf32>
    "tpu.trace_start"() <{level = 10 : i32, message = "bqd,bkd->bqk"}> : () -> ()
    %cst_20 = arith.constant dense<0.000000e+00> : vector<2x16x16xf32>
    %70 = tpu.matmul %67, %68, %cst_20 {dimension_numbers = #tpu.dot_dimension_numbers<[2], [2], [1], [1], [0, 0, 0, 1, 1, 1], [0], [0]>} : vector<2x16x16xf32>, vector<2x16x16xf32>, vector<2x16x16xf32> -> vector<2x16x16xf32>
    "tpu.trace_stop"() : () -> ()
    %71 = vector.shape_cast %10 : vector<16x16xf32> to vector<1x16x16xf32>
    %72 = vector.broadcast %71 : vector<1x16x16xf32> to vector<2x16x16xf32>
    %73 = arith.addf %70, %72 : vector<2x16x16xf32>
    %cst_21 = arith.constant dense<0xFF800000> : vector<2x16xf32>
    %74 = vector.multi_reduction <maximumf>, %73, %cst_21 [2] : vector<2x16x16xf32> to vector<2x16xf32>
    %75 = vector.shape_cast %74 : vector<2x16xf32> to vector<2x16x1xf32>
    %76 = vector.broadcast %75 : vector<2x16x1xf32> to vector<2x16x16xf32>
    %77 = arith.subf %73, %76 : vector<2x16x16xf32>
    %78 = math.exp %77 : vector<2x16x16xf32>
    %cst_22 = arith.constant dense<0.000000e+00> : vector<2x16xf32>
    %79 = vector.multi_reduction <add>, %78, %cst_22 [2] : vector<2x16x16xf32> to vector<2x16xf32>
    %80 = vector.shape_cast %79 : vector<2x16xf32> to vector<2x16x1xf32>
    %81 = tpu.reciprocal %80 : vector<2x16x1xf32> -> vector<2x16x1xf32>
    %82 = vector.broadcast %81 : vector<2x16x1xf32> to vector<2x16x16xf32>
    %83 = arith.mulf %78, %82 : vector<2x16x16xf32>
    "tpu.trace_start"() <{level = 10 : i32, message = "bqk,bkd->bqd"}> : () -> ()
    %cst_23 = arith.constant dense<0.000000e+00> : vector<2x16x16xf32>
    %84 = tpu.matmul %83, %69, %cst_23 {dimension_numbers = #tpu.dot_dimension_numbers<[2], [1], [1], [2], [0, 0, 0, 1, 1, 2], [0], [0]>} : vector<2x16x16xf32>, vector<2x16x16xf32>, vector<2x16x16xf32> -> vector<2x16x16xf32>
    "tpu.trace_stop"() : () -> ()
    %85 = vector.shape_cast %84 : vector<2x16x16xf32> to vector<32x16xf32>
    %86 = vector.extract_strided_slice %13 {offsets = [16, 0], sizes = [16, 32], strides = [1, 1]} : vector<32x32xf32> to vector<16x32xf32>
    %cst_24 = arith.constant dense<0.000000e+00> : vector<32x32xf32>
    %87 = tpu.matmul %85, %86, %cst_24 {dimension_numbers = #tpu.dot_dimension_numbers<[1], [0], [0], [1], [0, 0, 1, 1], [], []>} : vector<32x16xf32>, vector<16x32xf32>, vector<32x32xf32> -> vector<32x32xf32>
    %88 = arith.addf %66, %87 : vector<32x32xf32>
    %89 = arith.addf %16, %88 : vector<32x32xf32>
    %90 = vector.broadcast %3 : vector<1x32xf32> to vector<32x32xf32>
    %91 = arith.addf %89, %90 : vector<32x32xf32>
    %cst_25 = arith.constant dense<0.000000e+00> : vector<32xf32>
    %92 = vector.multi_reduction <add>, %91, %cst_25 [1] : vector<32x32xf32> to vector<32xf32>
    %93 = vector.shape_cast %92 : vector<32xf32> to vector<32x1xf32>
    %cst_26 = arith.constant 3.200000e+01 : f32
    %94 = vector.broadcast %cst_26 : f32 to vector<32x1xf32>
    %95 = arith.divf %93, %94 : vector<32x1xf32>
    %96 = vector.broadcast %95 : vector<32x1xf32> to vector<32x32xf32>
    %97 = arith.subf %91, %96 : vector<32x32xf32>
    %98 = arith.mulf %97, %97 : vector<32x32xf32>
    %cst_27 = arith.constant dense<0.000000e+00> : vector<32xf32>
    %99 = vector.multi_reduction <add>, %98, %cst_27 [1] : vector<32x32xf32> to vector<32xf32>
    %100 = vector.shape_cast %99 : vector<32xf32> to vector<32x1xf32>
    %cst_28 = arith.constant 3.200000e+01 : f32
    %101 = vector.broadcast %cst_28 : f32 to vector<32x1xf32>
    %102 = arith.divf %100, %101 : vector<32x1xf32>
    %103 = vector.broadcast %95 : vector<32x1xf32> to vector<32x32xf32>
    %104 = arith.subf %91, %103 : vector<32x32xf32>
    %cst_29 = arith.constant 9.99999974E-6 : f32
    %105 = vector.broadcast %cst_29 : f32 to vector<32x1xf32>
    %106 = arith.addf %102, %105 : vector<32x1xf32>
    %107 = math.rsqrt %106 : vector<32x1xf32>
    %108 = vector.broadcast %107 : vector<32x1xf32> to vector<32x32xf32>
    %109 = arith.mulf %104, %108 : vector<32x32xf32>
    %110 = vector.broadcast %4 : vector<1x32xf32> to vector<32x32xf32>
    %111 = arith.mulf %109, %110 : vector<32x32xf32>
    %112 = vector.broadcast %5 : vector<1x32xf32> to vector<32x32xf32>
    %113 = arith.addf %111, %112 : vector<32x32xf32>
    %cst_30 = arith.constant dense<0.000000e+00> : vector<32x128xf32>
    %114 = tpu.matmul %113, %14, %cst_30 {dimension_numbers = #tpu.dot_dimension_numbers<[1], [0], [0], [1], [0, 0, 1, 1], [], []>} : vector<32x32xf32>, vector<32x128xf32>, vector<32x128xf32> -> vector<32x128xf32>
    %115 = vector.broadcast %7 : vector<1x128xf32> to vector<32x128xf32>
    %116 = arith.addf %114, %115 : vector<32x128xf32>
    %cst_31 = arith.constant 0.000000e+00 : f32
    %117 = vector.broadcast %cst_31 : f32 to vector<32x128xf32>
    %118 = arith.maximumf %116, %117 : vector<32x128xf32>
    %cst_32 = arith.constant dense<0.000000e+00> : vector<32x32xf32>
    %119 = tpu.matmul %118, %15, %cst_32 {dimension_numbers = #tpu.dot_dimension_numbers<[1], [0], [0], [1], [0, 0, 1, 1], [], []>} : vector<32x128xf32>, vector<128x32xf32>, vector<32x32xf32> -> vector<32x32xf32>
    %120 = vector.broadcast %6 : vector<1x32xf32> to vector<32x32xf32>
    %121 = arith.addf %119, %120 : vector<32x32xf32>
    %122 = arith.addf %91, %121 : vector<32x32xf32>
    %c0_33 = arith.constant 0 : index
    %c0_34 = arith.constant 0 : index
    %123 = vector.load %arg6[%c0_33, %c0_34] : memref<32x32xf32, #tpu.memory_space<vmem>>, vector<32x32xf32>
    tpu.vector_store %arg6[%c0_33, %c0_34], %122 {strides = array<i32>} : memref<32x32xf32, #tpu.memory_space<vmem>>, vector<32x32xf32>,
    return
  }
  func.func @transform_0(%arg0: i32) -> (i32, i32) {
    %c0_i32 = arith.constant 0 : i32
    %c0_i32_0 = arith.constant 0 : i32
    return %arg0, %c0_i32 : i32, i32
  }
  func.func @transform_1(%arg0: i32) -> (i32, i32) {
    %c0_i32 = arith.constant 0 : i32
    %c0_i32_0 = arith.constant 0 : i32
    %c0_i32_1 = arith.constant 0 : i32
    return %c0_i32, %c0_i32_0 : i32, i32
  }
  func.func @transform_2(%arg0: i32) -> (i32, i32) {
    %c0_i32 = arith.constant 0 : i32
    %c0_i32_0 = arith.constant 0 : i32
    %c0_i32_1 = arith.constant 0 : i32
    return %c0_i32, %c0_i32_0 : i32, i32
  }
  func.func @transform_3(%arg0: i32) -> (i32, i32) {
    %c0_i32 = arith.constant 0 : i32
    %c0_i32_0 = arith.constant 0 : i32
    %c0_i32_1 = arith.constant 0 : i32
    return %c0_i32, %c0_i32_0 : i32, i32
  }
  func.func @transform_4(%arg0: i32) -> (i32, i32) {
    %c0_i32 = arith.constant 0 : i32
    %c0_i32_0 = arith.constant 0 : i32
    %c0_i32_1 = arith.constant 0 : i32
    return %c0_i32, %c0_i32_0 : i32, i32
  }
  func.func @transform_5(%arg0: i32) -> (i32, i32) {
    %c0_i32 = arith.constant 0 : i32
    %c0_i32_0 = arith.constant 0 : i32
    return %arg0, %c0_i32 : i32, i32
  }
}

</mosaic_0001>

<llo_original>
// kernel: tpu_custom_call.1
$region0: #{tpu_custom_call.1}
  #allocation0 [shape = 'u32[]', space=smem, size = 0x4, offset = 0x4, fixed_abs, tag = 'smem constant byte address 0x4 - core index']
  #allocation1 [shape = 'u32[72,128]{1,0:T(1,128)}', space=vmem, size = 0x9000, scoped, tag = 'internal scratch']
  %s0 = inlined_call_operand.vmem [shape: f32[32,32], index: 0, kind: input, shape index: {}]
  %s1 = inlined_call_operand.vmem [shape: f32[8,128], index: 1, kind: input, shape index: {}]
  %s2 = inlined_call_operand.vmem [shape: f32[16,112], index: 2, kind: input, shape index: {}]
  %s3 = inlined_call_operand.vmem [shape: f32[32,256], index: 3, kind: input, shape index: {}]
  %s4 = inlined_call_operand.vmem [shape: f32[128,32], index: 4, kind: input, shape index: {}]
  %s5 = inlined_call_operand.hbm [shape: f32[32,32], index: 5, kind: output, shape index: {}]
  %s6 = sld [smem:[#allocation0]]
  $region30: #{tpu_custom_call.1} parent=0
    _
  %s8 = ssub.s32 1, %s6
  %s9 = scalar_select 0, %s8, %s6
  $region1: #{tpu_custom_call.1} parent=0
    #allocation2 [shape = 'u8[16384]{0}', space=vmem, size = 0x4000, scoped, tag = 'output window, operand 0, single buffered']
    #allocation3 [shape = 's32[1]{0}', space=sflag, size = 0x4, scoped, tag = 'scoped memory for tpu_custom_call.1']
    %10 = vsyncpa [#allocation3], 0
    // Predicated region
    $region2: #{tpu_custom_call.1} parent=1 // pred_check
      _
    $region3: #{tpu_custom_call.1} parent=1 // pred_check_branch
      %12 = sbr.rel (0) target = $region5
    $region4: #{tpu_custom_call.1} parent=1 // pred_region
      _
    $region5: #{tpu_custom_call.1} parent=1 // pred_fallthru
      _
    // Predicated region
    $region6: #{tpu_custom_call.1} parent=1 // pred_check
      _
    $region7: #{tpu_custom_call.1} parent=1 // pred_check_branch
      %14 = sbr.rel (0) target = $region9
    $region8: #{tpu_custom_call.1} parent=1 // pred_region
      _
    $region9: #{tpu_custom_call.1} parent=1 // pred_fallthru
      _
    // Predicated region
    $region10: #{tpu_custom_call.1} parent=1 // pred_check
      _
    $region11: #{tpu_custom_call.1} parent=1 // pred_check_branch
      %16 = sbr.rel (0) target = $region13
    $region12: #{tpu_custom_call.1} parent=1 // pred_region
      _
    $region13: #{tpu_custom_call.1} parent=1 // pred_fallthru
      _
    // Predicated region
    $region14: #{tpu_custom_call.1} parent=1 // pred_check
      _
    $region15: #{tpu_custom_call.1} parent=1 // pred_check_branch
      %18 = sbr.rel (0) target = $region17
    $region16: #{tpu_custom_call.1} parent=1 // pred_region
      _
    $region17: #{tpu_custom_call.1} parent=1 // pred_fallthru
      _
    // Predicated region
    $region18: #{tpu_custom_call.1} parent=1 // pred_check
      _
    $region19: #{tpu_custom_call.1} parent=1 // pred_check_branch
      %20 = sbr.rel (0) target = $region21
    $region20: #{tpu_custom_call.1} parent=1 // pred_region
      _
    $region21: #{tpu_custom_call.1} parent=1 // pred_fallthru
      _
    %v21 = vld [vmem:[%s1] sm:$0xff]
    %v22 = vld [vmem:[%s2] sm:$0xff]
    %v23 = vld [vmem:[%s2 + $0x8] sm:$0xff]
    %v24 = vld [vmem:[%s3] sm:$0xff]
    %v25 = vld [vmem:[%s3 + $0x8] sm:$0xff]
    %v26 = vld [vmem:[%s3 + $0x10] sm:$0xff]
    %v27 = vld [vmem:[%s3 + $0x18] sm:$0xff]
    %v28 = vld [vmem:[%s3 + $0x20] sm:$0xff]
    %v29 = vld [vmem:[%s3 + $0x28] sm:$0xff]
    %v30 = vld [vmem:[%s3 + $0x30] sm:$0xff]
    %v31 = vld [vmem:[%s3 + $0x38] sm:$0xff]
    %v32 = vld [vmem:[%s4] sm:$0xff]
    %v33 = vld [vmem:[%s4 + $0x8] sm:$0xff]
    %v34 = vld [vmem:[%s4 + $0x10] sm:$0xff]
    %v35 = vld [vmem:[%s4 + $0x18] sm:$0xff]
    %v36 = vld [vmem:[%s4 + $0x20] sm:$0xff]
    %v37 = vld [vmem:[%s4 + $0x28] sm:$0xff]
    %v38 = vld [vmem:[%s4 + $0x30] sm:$0xff]
    %v39 = vld [vmem:[%s4 + $0x38] sm:$0xff]
    %v40 = vld [vmem:[%s4 + $0x40] sm:$0xff]
    %v41 = vld [vmem:[%s4 + $0x48] sm:$0xff]
    %v42 = vld [vmem:[%s4 + $0x50] sm:$0xff]
    %v43 = vld [vmem:[%s4 + $0x58] sm:$0xff]
    %v44 = vld [vmem:[%s4 + $0x60] sm:$0xff]
    %v45 = vld [vmem:[%s4 + $0x68] sm:$0xff]
    %v46 = vld [vmem:[%s4 + $0x70] sm:$0xff]
    %v47 = vld [vmem:[%s4 + $0x78] sm:$0xff]
    %v48 = vld [vmem:[%s0] sm:$0xff]
    %v49 = vld [vmem:[%s0 + $0x8] sm:$0xff]
    %v50 = vld [vmem:[%s0 + $0x10] sm:$0xff]
    %v51 = vld [vmem:[%s0 + $0x18] sm:$0xff]
    %vm52 = vcmask 261120
    %v53 = vsel %vm52, %v48, 0.0
    %54 = vadd.xlane.f32.xlu0 %v53
    %v55 = vpop.xlane.xlu0 %54
    %v56 = vsel %vm52, %v49, 0.0
    %57 = vadd.xlane.f32.xlu0 %v56
    %v58 = vpop.xlane.xlu0 %57
    %v59 = vsel %vm52, %v50, 0.0
    %60 = vadd.xlane.f32.xlu0 %v59
    %v61 = vpop.xlane.xlu0 %60
    %v62 = vsel %vm52, %v51, 0.0
    %63 = vadd.xlane.f32.xlu0 %v62
    %v64 = vpop.xlane.xlu0 %63
    %v65 = vrcp.pop 32.0
    %v66 = vmul.f32 32.0, %v65
    %v67 = vsub.f32 1.0, %v66
    %v68 = vmul.f32 %v65, %v67
    %v69 = vadd.f32 %v65, %v68
    %vm70 = vweird.f32 %v65
    %v71 = vsel %vm70, %v65, %v69
    %v72 = vmul.f32 %v55, %v71
    %v73 = vmul.f32 %v58, %v71
    %v74 = vmul.f32 %v61, %v71
    %v75 = vmul.f32 %v64, %v71
    %v76 = vsub.f32 %v48, %v72
    %v77 = vsub.f32 %v49, %v73
    %v78 = vsub.f32 %v50, %v74
    %v79 = vsub.f32 %v51, %v75
    %v80 = vmul.f32 %v76, %v76
    %v81 = vmul.f32 %v77, %v77
    %v82 = vmul.f32 %v78, %v78
    %v83 = vmul.f32 %v79, %v79
    %v84 = vsel %vm52, %v80, 0.0
    %85 = vadd.xlane.f32.xlu0 %v84
    %v86 = vpop.xlane.xlu0 %85
    %v87 = vsel %vm52, %v81, 0.0
    %88 = vadd.xlane.f32.xlu0 %v87
    %v89 = vpop.xlane.xlu0 %88
    %v90 = vsel %vm52, %v82, 0.0
    %91 = vadd.xlane.f32.xlu0 %v90
    %v92 = vpop.xlane.xlu0 %91
    %v93 = vsel %vm52, %v83, 0.0
    %94 = vadd.xlane.f32.xlu0 %v93
    %v95 = vpop.xlane.xlu0 %94
    %v96 = vmul.f32 %v86, %v71
    %v97 = vmul.f32 %v89, %v71
    %v98 = vmul.f32 %v92, %v71
    %v99 = vmul.f32 %v95, %v71
    %v100 = vadd.f32 %v96, 1e-05
    %v101 = vadd.f32 %v97, 1e-05
    %v102 = vadd.f32 %v98, 1e-05
    %v103 = vadd.f32 %v99, 1e-05
    %v104 = vrsqrt.pop %v100
    %v105 = vmul.f32 %v104, %v100
    %v106 = vmul.f32 %v105, %v104
    %v107 = vmul.f32 0.5, %v106
    %v108 = vsub.f32 1.5, %v107
    %v109 = vmul.f32 %v104, %v108
    %vm110 = vweird.f32 %v100
    %vm111 = vweird.f32 %v104
    %vm112 = vmor %vm110, %vm111
    %v113 = vsel %vm112, %v104, %v109
    %v114 = vrsqrt.pop %v101
    %v115 = vmul.f32 %v114, %v101
    %v116 = vmul.f32 %v115, %v114
    %v117 = vmul.f32 0.5, %v116
    %v118 = vsub.f32 1.5, %v117
    %v119 = vmul.f32 %v114, %v118
    %vm120 = vweird.f32 %v101
    %vm121 = vweird.f32 %v114
    %vm122 = vmor %vm120, %vm121
    %v123 = vsel %vm122, %v114, %v119
    %v124 = vrsqrt.pop %v102
    %v125 = vmul.f32 %v124, %v102
    %v126 = vmul.f32 %v125, %v124
    %v127 = vmul.f32 0.5, %v126
    %v128 = vsub.f32 1.5, %v127
    %v129 = vmul.f32 %v124, %v128
    %vm130 = vweird.f32 %v102
    %vm131 = vweird.f32 %v124
    %vm132 = vmor %vm130, %vm131
    %v133 = vsel %vm132, %v124, %v129
    %v134 = vrsqrt.pop %v103
    %v135 = vmul.f32 %v134, %v103
    %v136 = vmul.f32 %v135, %v134
    %v137 = vmul.f32 0.5, %v136
    %v138 = vsub.f32 1.5, %v137
    %v139 = vmul.f32 %v134, %v138
    %vm140 = vweird.f32 %v103
    %vm141 = vweird.f32 %v134
    %vm142 = vmor %vm140, %vm141
    %v143 = vsel %vm142, %v134, %v139
    %v144 = vmul.f32 %v76, %v113
    %v145 = vmul.f32 %v77, %v123
    %v146 = vmul.f32 %v78, %v133
    %v147 = vmul.f32 %v79, %v143
    %v148 = vperm.slane %v21, 0
    %v149 = vmul.f32 %v144, %v148
    %v150 = vmul.f32 %v145, %v148
    %v151 = vmul.f32 %v146, %v148
    %v152 = vmul.f32 %v147, %v148
    %v153 = vperm.slane %v21, 1
    %v154 = vadd.f32 %v149, %v153
    %v155 = vadd.f32 %v150, %v153
    %v156 = vadd.f32 %v151, %v153
    %v157 = vadd.f32 %v152, %v153
    %v159 = vsel %vm52, %v154, 0
    %v162 = vsel %vm52, %v155, 0
    %v165 = vsel %vm52, %v156, 0
    %v168 = vsel %vm52, %v157, 0
    %170 = vmatpush.msra.mxu0 0.0
    %171 = vmatpush.msra.mxu0 0.0
    %172 = vmatpush.msra.mxu0 0.0
    %173 = vmatpush.msra.mxu0 0.0
    %174 = vmatpush.msra.mxu0 0.0
    %175 = vmatpush.msra.mxu0 0.0
    %176 = vmatpush.msra.mxu0 0.0
    %177 = vmatpush.msra.mxu0 0.0
    %178 = vmatpush.msra.mxu0 0.0
    %179 = vmatpush.msra.mxu0 0.0
    %180 = vmatpush.msra.mxu0 0.0
    %181 = vmatpush.msra.mxu0 0.0
    %182 = vmatpush.msra.mxu0 %v30
    %183 = vmatpush.msra.mxu0 %v28
    %184 = vmatpush.msra.mxu0 %v26
    %185 = vmatpush.msra.mxu0 %v24
    %186 = vmatmul.f32.gmra.mxu0 %v159
    %v187 = vpop.f32.mrf.mxu0
    %v188 = vadd.f32 0.0, %v187
    %189 = vmatmul.f32.gmra.mxu0 %v162
    %v190 = vpop.f32.mrf.mxu0
    %v191 = vadd.f32 0.0, %v190
    %192 = vmatmul.f32.gmra.mxu0 %v165
    %v193 = vpop.f32.mrf.mxu0
    %v194 = vadd.f32 0.0, %v193
    %195 = vmatmul.f32.gmra.mxu0 %v168
    %v196 = vpop.f32.mrf.mxu0
    %v197 = vadd.f32 0.0, %v196
    %198 = vdwg.mxu0
    %v199 = vadd.f32 %v188, %v22
    %v200 = vadd.f32 %v191, %v23
    %v201 = vadd.f32 %v194, %v22
    %v202 = vadd.f32 %v197, %v23
    %205 = vrot.lane.b32.xlu0 %v199, 96
    %v206 = vpop.permute.xlu0 %205
    %207 = vrot.lane.b32.xlu0 %v200, 96
    %v208 = vpop.permute.xlu0 %207
    %211 = vrot.lane.b32.xlu0 %v22, 32
    %v212 = vpop.permute.xlu0 %211
    %213 = vrot.lane.b32.xlu0 %v23, 32
    %v214 = vpop.permute.xlu0 %213
    %vm217 = vcmask 130048
    %v218 = vsel %vm217, %v199, 0
    %v220 = vsel %vm217, %v200, 0
    %v222 = vsel %vm217, %v206, 0
    %v224 = vsel %vm217, %v208, 0
    %226 = vmatpush.xpose.msra.mxu0 0.0
    %227 = vmatpush.xpose.msra.mxu0 0.0
    %228 = vmatpush.xpose.msra.mxu0 0.0
    %229 = vmatpush.xpose.msra.mxu0 0.0
    %230 = vmatpush.xpose.msra.mxu0 0.0
    %231 = vmatpush.xpose.msra.mxu0 0.0
    %232 = vmatpush.xpose.msra.mxu0 0.0
    %233 = vmatpush.xpose.msra.mxu0 0.0
    %234 = vmatpush.xpose.msra.mxu0 0.0
    %235 = vmatpush.xpose.msra.mxu0 0.0
    %236 = vmatpush.xpose.msra.mxu0 0.0
    %237 = vmatpush.xpose.msra.mxu0 0.0
    %238 = vmatpush.xpose.msra.mxu0 0.0
    %239 = vmatpush.xpose.msra.mxu0 0.0
    %240 = vmatpush.xpose.msra.mxu0 %v224
    %241 = vmatpush.xpose.msra.mxu0 %v222
    %242 = vmatmul.f32.gmra.mxu0 %v218
    %v243 = vpop.f32.mrf.mxu0
    %v244 = vadd.f32 %v212, %v243
    %245 = vmatmul.f32.gmra.mxu0 %v220
    %v246 = vpop.f32.mrf.mxu0
    %v247 = vadd.f32 %v214, %v246
    %248 = vdwg.mxu0
    %251 = vrot.lane.b32.xlu0 %v201, 96
    %v252 = vpop.permute.xlu0 %251
    %253 = vrot.lane.b32.xlu0 %v202, 96
    %v254 = vpop.permute.xlu0 %253
    %v255 = vsel %vm217, %v201, 0
    %v257 = vsel %vm217, %v202, 0
    %v259 = vsel %vm217, %v252, 0
    %v261 = vsel %vm217, %v254, 0
    %263 = vmatpush.xpose.msra.mxu0 0.0
    %264 = vmatpush.xpose.msra.mxu0 0.0
    %265 = vmatpush.xpose.msra.mxu0 0.0
    %266 = vmatpush.xpose.msra.mxu0 0.0
    %267 = vmatpush.xpose.msra.mxu0 0.0
    %268 = vmatpush.xpose.msra.mxu0 0.0
    %269 = vmatpush.xpose.msra.mxu0 0.0
    %270 = vmatpush.xpose.msra.mxu0 0.0
    %271 = vmatpush.xpose.msra.mxu0 0.0
    %272 = vmatpush.xpose.msra.mxu0 0.0
    %273 = vmatpush.xpose.msra.mxu0 0.0
    %274 = vmatpush.xpose.msra.mxu0 0.0
    %275 = vmatpush.xpose.msra.mxu0 0.0
    %276 = vmatpush.xpose.msra.mxu0 0.0
    %277 = vmatpush.xpose.msra.mxu0 %v261
    %278 = vmatpush.xpose.msra.mxu0 %v259
    %279 = vmatmul.f32.gmra.mxu0 %v255
    %v280 = vpop.f32.mrf.mxu0
    %v281 = vadd.f32 %v212, %v280
    %282 = vmatmul.f32.gmra.mxu0 %v257
    %v283 = vpop.f32.mrf.mxu0
    %v284 = vadd.f32 %v214, %v283
    %285 = vdwg.mxu0
    %v286 = vsel %vm217, %v244, -inf
    %287 = vmax.xlane.f32.xlu0 %v286
    %v288 = vpop.xlane.xlu0 %287
    %v289 = vsel %vm217, %v247, -inf
    %290 = vmax.xlane.f32.xlu0 %v289
    %v291 = vpop.xlane.xlu0 %290
    %v292 = vsel %vm217, %v281, -inf
    %293 = vmax.xlane.f32.xlu0 %v292
    %v294 = vpop.xlane.xlu0 %293
    %v295 = vsel %vm217, %v284, -inf
    %296 = vmax.xlane.f32.xlu0 %v295
    %v297 = vpop.xlane.xlu0 %296
    %v298 = vsub.f32 %v244, %v288
    %v299 = vsub.f32 %v247, %v291
    %v300 = vsub.f32 %v281, %v294
    %v301 = vsub.f32 %v284, %v297
    %v302 = vmul.f32 %v298, 1.442695
    %v303 = vpow.pop %v302
    %v304 = vmul.f32 %v299, 1.442695
    %v305 = vpow.pop %v304
    %v306 = vmul.f32 %v300, 1.442695
    %v307 = vpow.pop %v306
    %v308 = vmul.f32 %v301, 1.442695
    %v309 = vpow.pop %v308
    %v310 = vsel %vm217, %v303, 0.0
    %311 = vadd.xlane.f32.xlu0 %v310
    %v312 = vpop.xlane.xlu0 %311
    %v313 = vsel %vm217, %v305, 0.0
    %314 = vadd.xlane.f32.xlu0 %v313
    %v315 = vpop.xlane.xlu0 %314
    %v316 = vsel %vm217, %v307, 0.0
    %317 = vadd.xlane.f32.xlu0 %v316
    %v318 = vpop.xlane.xlu0 %317
    %v319 = vsel %vm217, %v309, 0.0
    %320 = vadd.xlane.f32.xlu0 %v319
    %v321 = vpop.xlane.xlu0 %320
    %v322 = vrcp.pop %v312
    %v323 = vmul.f32 %v312, %v322
    %v324 = vsub.f32 1.0, %v323
    %v325 = vmul.f32 %v322, %v324
    %v326 = vadd.f32 %v322, %v325
    %vm327 = vweird.f32 %v312
    %vm328 = vweird.f32 %v322
    %vm329 = vmor %vm327, %vm328
    %v330 = vsel %vm329, %v322, %v326
    %v331 = vand.u32 2147483647, %v312
    %vm332 = vcmp.eq.f32.partialorder %v331, 8.507059e+37
    %v333 = vand.u32 %v312, 2147483648
    %v334 = vor.u32 1.1754944e-38, %v333
    %v335 = vsel %vm332, %v334, %v330
    %v336 = vrcp.pop %v315
    %v337 = vmul.f32 %v315, %v336
    %v338 = vsub.f32 1.0, %v337
    %v339 = vmul.f32 %v336, %v338
    %v340 = vadd.f32 %v336, %v339
    %vm341 = vweird.f32 %v315
    %vm342 = vweird.f32 %v336
    %vm343 = vmor %vm341, %vm342
    %v344 = vsel %vm343, %v336, %v340
    %v345 = vand.u32 2147483647, %v315
    %vm346 = vcmp.eq.f32.partialorder %v345, 8.507059e+37
    %v347 = vand.u32 %v315, 2147483648
    %v348 = vor.u32 1.1754944e-38, %v347
    %v349 = vsel %vm346, %v348, %v344
    %v350 = vrcp.pop %v318
    %v351 = vmul.f32 %v318, %v350
    %v352 = vsub.f32 1.0, %v351
    %v353 = vmul.f32 %v350, %v352
    %v354 = vadd.f32 %v350, %v353
    %vm355 = vweird.f32 %v318
    %vm356 = vweird.f32 %v350
    %vm357 = vmor %vm355, %vm356
    %v358 = vsel %vm357, %v350, %v354
    %v359 = vand.u32 2147483647, %v318
    %vm360 = vcmp.eq.f32.partialorder %v359, 8.507059e+37
    %v361 = vand.u32 %v318, 2147483648
    %v362 = vor.u32 1.1754944e-38, %v361
    %v363 = vsel %vm360, %v362, %v358
    %v364 = vrcp.pop %v321
    %v365 = vmul.f32 %v321, %v364
    %v366 = vsub.f32 1.0, %v365
    %v367 = vmul.f32 %v364, %v366
    %v368 = vadd.f32 %v364, %v367
    %vm369 = vweird.f32 %v321
    %vm370 = vweird.f32 %v364
    %vm371 = vmor %vm369, %vm370
    %v372 = vsel %vm371, %v364, %v368
    %v373 = vand.u32 2147483647, %v321
    %vm374 = vcmp.eq.f32.partialorder %v373, 8.507059e+37
    %v375 = vand.u32 %v321, 2147483648
    %v376 = vor.u32 1.1754944e-38, %v375
    %v377 = vsel %vm374, %v376, %v372
    %v378 = vmul.f32 %v303, %v335
    %v379 = vmul.f32 %v305, %v349
    %v380 = vmul.f32 %v307, %v363
    %v381 = vmul.f32 %v309, %v377
    %382 = vrot.lane.b32.xlu0 %v199, 64
    %v383 = vpop.permute.xlu0 %382
    %384 = vrot.lane.b32.xlu0 %v200, 64
    %v385 = vpop.permute.xlu0 %384
    %v389 = vsel %vm217, %v378, 0
    %v392 = vsel %vm217, %v379, 0
    %394 = vmatpush.msra.mxu0 0.0
    %395 = vmatpush.msra.mxu0 0.0
    %396 = vmatpush.msra.mxu0 0.0
    %397 = vmatpush.msra.mxu0 0.0
    %398 = vmatpush.msra.mxu0 0.0
    %399 = vmatpush.msra.mxu0 0.0
    %400 = vmatpush.msra.mxu0 0.0
    %401 = vmatpush.msra.mxu0 0.0
    %402 = vmatpush.msra.mxu0 0.0
    %403 = vmatpush.msra.mxu0 0.0
    %404 = vmatpush.msra.mxu0 0.0
    %405 = vmatpush.msra.mxu0 0.0
    %406 = vmatpush.msra.mxu0 0.0
    %407 = vmatpush.msra.mxu0 0.0
    %408 = vmatpush.msra.mxu0 %v385
    %409 = vmatpush.msra.mxu0 %v383
    %410 = vmatmul.f32.gmra.mxu0 %v389
    %v411 = vpop.f32.mrf.mxu0
    %v412 = vadd.f32 0.0, %v411
    %413 = vmatmul.f32.gmra.mxu0 %v392
    %v414 = vpop.f32.mrf.mxu0
    %v415 = vadd.f32 0.0, %v414
    %416 = vdwg.mxu0
    %417 = vrot.lane.b32.xlu0 %v201, 64
    %v418 = vpop.permute.xlu0 %417
    %419 = vrot.lane.b32.xlu0 %v202, 64
    %v420 = vpop.permute.xlu0 %419
    %v424 = vsel %vm217, %v380, 0
    %v427 = vsel %vm217, %v381, 0
    %429 = vmatpush.msra.mxu0 0.0
    %430 = vmatpush.msra.mxu0 0.0
    %431 = vmatpush.msra.mxu0 0.0
    %432 = vmatpush.msra.mxu0 0.0
    %433 = vmatpush.msra.mxu0 0.0
    %434 = vmatpush.msra.mxu0 0.0
    %435 = vmatpush.msra.mxu0 0.0
    %436 = vmatpush.msra.mxu0 0.0
    %437 = vmatpush.msra.mxu0 0.0
    %438 = vmatpush.msra.mxu0 0.0
    %439 = vmatpush.msra.mxu0 0.0
    %440 = vmatpush.msra.mxu0 0.0
    %441 = vmatpush.msra.mxu0 0.0
    %442 = vmatpush.msra.mxu0 0.0
    %443 = vmatpush.msra.mxu0 %v420
    %444 = vmatpush.msra.mxu0 %v418
    %445 = vmatmul.f32.gmra.mxu0 %v424
    %v446 = vpop.f32.mrf.mxu0
    %v447 = vadd.f32 0.0, %v446
    %448 = vmatmul.f32.gmra.mxu0 %v427
    %v449 = vpop.f32.mrf.mxu0
    %v450 = vadd.f32 0.0, %v449
    %451 = vdwg.mxu0
    %452 = vrot.lane.b32.xlu0 %v199, 112
    %v453 = vpop.permute.xlu0 %452
    %454 = vrot.lane.b32.xlu0 %v200, 112
    %v455 = vpop.permute.xlu0 %454
    %456 = vrot.lane.b32.xlu0 %v199, 80
    %v457 = vpop.permute.xlu0 %456
    %458 = vrot.lane.b32.xlu0 %v200, 80
    %v459 = vpop.permute.xlu0 %458
    %v460 = vsel %vm217, %v453, 0
    %v462 = vsel %vm217, %v455, 0
    %v464 = vsel %vm217, %v457, 0
    %v466 = vsel %vm217, %v459, 0
    %468 = vmatpush.xpose.msra.mxu0 0.0
    %469 = vmatpush.xpose.msra.mxu0 0.0
    %470 = vmatpush.xpose.msra.mxu0 0.0
    %471 = vmatpush.xpose.msra.mxu0 0.0
    %472 = vmatpush.xpose.msra.mxu0 0.0
    %473 = vmatpush.xpose.msra.mxu0 0.0
    %474 = vmatpush.xpose.msra.mxu0 0.0
    %475 = vmatpush.xpose.msra.mxu0 0.0
    %476 = vmatpush.xpose.msra.mxu0 0.0
    %477 = vmatpush.xpose.msra.mxu0 0.0
    %478 = vmatpush.xpose.msra.mxu0 0.0
    %479 = vmatpush.xpose.msra.mxu0 0.0
    %480 = vmatpush.xpose.msra.mxu0 0.0
    %481 = vmatpush.xpose.msra.mxu0 0.0
    %482 = vmatpush.xpose.msra.mxu0 %v466
    %483 = vmatpush.xpose.msra.mxu0 %v464
    %484 = vmatmul.f32.gmra.mxu0 %v460
    %v485 = vpop.f32.mrf.mxu0
    %v486 = vadd.f32 %v212, %v485
    %487 = vmatmul.f32.gmra.mxu0 %v462
    %v488 = vpop.f32.mrf.mxu0
    %v489 = vadd.f32 %v214, %v488
    %490 = vdwg.mxu0
    %491 = vrot.lane.b32.xlu0 %v201, 112
    %v492 = vpop.permute.xlu0 %491
    %493 = vrot.lane.b32.xlu0 %v202, 112
    %v494 = vpop.permute.xlu0 %493
    %495 = vrot.lane.b32.xlu0 %v201, 80
    %v496 = vpop.permute.xlu0 %495
    %497 = vrot.lane.b32.xlu0 %v202, 80
    %v498 = vpop.permute.xlu0 %497
    %v499 = vsel %vm217, %v492, 0
    %v501 = vsel %vm217, %v494, 0
    %v503 = vsel %vm217, %v496, 0
    %v505 = vsel %vm217, %v498, 0
    %507 = vmatpush.xpose.msra.mxu0 0.0
    %508 = vmatpush.xpose.msra.mxu0 0.0
    %509 = vmatpush.xpose.msra.mxu0 0.0
    %510 = vmatpush.xpose.msra.mxu0 0.0
    %511 = vmatpush.xpose.msra.mxu0 0.0
    %512 = vmatpush.xpose.msra.mxu0 0.0
    %513 = vmatpush.xpose.msra.mxu0 0.0
    %514 = vmatpush.xpose.msra.mxu0 0.0
    %515 = vmatpush.xpose.msra.mxu0 0.0
    %516 = vmatpush.xpose.msra.mxu0 0.0
    %517 = vmatpush.xpose.msra.mxu0 0.0
    %518 = vmatpush.xpose.msra.mxu0 0.0
    %519 = vmatpush.xpose.msra.mxu0 0.0
    %520 = vmatpush.xpose.msra.mxu0 0.0
    %521 = vmatpush.xpose.msra.mxu0 %v505
    %522 = vmatpush.xpose.msra.mxu0 %v503
    %523 = vmatmul.f32.gmra.mxu0 %v499
    %v524 = vpop.f32.mrf.mxu0
    %v525 = vadd.f32 %v212, %v524
    %526 = vmatmul.f32.gmra.mxu0 %v501
    %v527 = vpop.f32.mrf.mxu0
    %v528 = vadd.f32 %v214, %v527
    %529 = vdwg.mxu0
    %v530 = vsel %vm217, %v486, -inf
    %531 = vmax.xlane.f32.xlu0 %v530
    %v532 = vpop.xlane.xlu0 %531
    %v533 = vsel %vm217, %v489, -inf
    %534 = vmax.xlane.f32.xlu0 %v533
    %v535 = vpop.xlane.xlu0 %534
    %v536 = vsel %vm217, %v525, -inf
    %537 = vmax.xlane.f32.xlu0 %v536
    %v538 = vpop.xlane.xlu0 %537
    %v539 = vsel %vm217, %v528, -inf
    %540 = vmax.xlane.f32.xlu0 %v539
    %v541 = vpop.xlane.xlu0 %540
    %v542 = vsub.f32 %v486, %v532
    %v543 = vsub.f32 %v489, %v535
    %v544 = vsub.f32 %v525, %v538
    %v545 = vsub.f32 %v528, %v541
    %v546 = vmul.f32 %v542, 1.442695
    %v547 = vpow.pop %v546
    %v548 = vmul.f32 %v543, 1.442695
    %v549 = vpow.pop %v548
    %v550 = vmul.f32 %v544, 1.442695
    %v551 = vpow.pop %v550
    %v552 = vmul.f32 %v545, 1.442695
    %v553 = vpow.pop %v552
    %v554 = vsel %vm217, %v547, 0.0
    %555 = vadd.xlane.f32.xlu0 %v554
    %v556 = vpop.xlane.xlu0 %555
    %v557 = vsel %vm217, %v549, 0.0
    %558 = vadd.xlane.f32.xlu0 %v557
    %v559 = vpop.xlane.xlu0 %558
    %v560 = vsel %vm217, %v551, 0.0
    %561 = vadd.xlane.f32.xlu0 %v560
    %v562 = vpop.xlane.xlu0 %561
    %v563 = vsel %vm217, %v553, 0.0
    %564 = vadd.xlane.f32.xlu0 %v563
    %v565 = vpop.xlane.xlu0 %564
    %v566 = vrcp.pop %v556
    %v567 = vmul.f32 %v556, %v566
    %v568 = vsub.f32 1.0, %v567
    %v569 = vmul.f32 %v566, %v568
    %v570 = vadd.f32 %v566, %v569
    %vm571 = vweird.f32 %v556
    %vm572 = vweird.f32 %v566
    %vm573 = vmor %vm571, %vm572
    %v574 = vsel %vm573, %v566, %v570
    %v575 = vand.u32 2147483647, %v556
    %vm576 = vcmp.eq.f32.partialorder %v575, 8.507059e+37
    %v577 = vand.u32 %v556, 2147483648
    %v578 = vor.u32 1.1754944e-38, %v577
    %v579 = vsel %vm576, %v578, %v574
    %v580 = vrcp.pop %v559
    %v581 = vmul.f32 %v559, %v580
    %v582 = vsub.f32 1.0, %v581
    %v583 = vmul.f32 %v580, %v582
    %v584 = vadd.f32 %v580, %v583
    %vm585 = vweird.f32 %v559
    %vm586 = vweird.f32 %v580
    %vm587 = vmor %vm585, %vm586
    %v588 = vsel %vm587, %v580, %v584
    %v589 = vand.u32 2147483647, %v559
    %vm590 = vcmp.eq.f32.partialorder %v589, 8.507059e+37
    %v591 = vand.u32 %v559, 2147483648
    %v592 = vor.u32 1.1754944e-38, %v591
    %v593 = vsel %vm590, %v592, %v588
    %v594 = vrcp.pop %v562
    %v595 = vmul.f32 %v562, %v594
    %v596 = vsub.f32 1.0, %v595
    %v597 = vmul.f32 %v594, %v596
    %v598 = vadd.f32 %v594, %v597
    %vm599 = vweird.f32 %v562
    %vm600 = vweird.f32 %v594
    %vm601 = vmor %vm599, %vm600
    %v602 = vsel %vm601, %v594, %v598
    %v603 = vand.u32 2147483647, %v562
    %vm604 = vcmp.eq.f32.partialorder %v603, 8.507059e+37
    %v605 = vand.u32 %v562, 2147483648
    %v606 = vor.u32 1.1754944e-38, %v605
    %v607 = vsel %vm604, %v606, %v602
    %v608 = vrcp.pop %v565
    %v609 = vmul.f32 %v565, %v608
    %v610 = vsub.f32 1.0, %v609
    %v611 = vmul.f32 %v608, %v610
    %v612 = vadd.f32 %v608, %v611
    %vm613 = vweird.f32 %v565
    %vm614 = vweird.f32 %v608
    %vm615 = vmor %vm613, %vm614
    %v616 = vsel %vm615, %v608, %v612
    %v617 = vand.u32 2147483647, %v565
    %vm618 = vcmp.eq.f32.partialorder %v617, 8.507059e+37
    %v619 = vand.u32 %v565, 2147483648
    %v620 = vor.u32 1.1754944e-38, %v619
    %v621 = vsel %vm618, %v620, %v616
    %v622 = vmul.f32 %v547, %v579
    %v623 = vmul.f32 %v549, %v593
    %v624 = vmul.f32 %v551, %v607
    %v625 = vmul.f32 %v553, %v621
    %626 = vrot.lane.b32.xlu0 %v199, 48
    %v627 = vpop.permute.xlu0 %626
    %628 = vrot.lane.b32.xlu0 %v200, 48
    %v629 = vpop.permute.xlu0 %628
    %v633 = vsel %vm217, %v622, 0
    %v636 = vsel %vm217, %v623, 0
    %638 = vmatpush.msra.mxu0 0.0
    %639 = vmatpush.msra.mxu0 0.0
    %640 = vmatpush.msra.mxu0 0.0
    %641 = vmatpush.msra.mxu0 0.0
    %642 = vmatpush.msra.mxu0 0.0
    %643 = vmatpush.msra.mxu0 0.0
    %644 = vmatpush.msra.mxu0 0.0
    %645 = vmatpush.msra.mxu0 0.0
    %646 = vmatpush.msra.mxu0 0.0
    %647 = vmatpush.msra.mxu0 0.0
    %648 = vmatpush.msra.mxu0 0.0
    %649 = vmatpush.msra.mxu0 0.0
    %650 = vmatpush.msra.mxu0 0.0
    %651 = vmatpush.msra.mxu0 0.0
    %652 = vmatpush.msra.mxu0 %v629
    %653 = vmatpush.msra.mxu0 %v627
    %654 = vmatmul.f32.gmra.mxu0 %v633
    %v655 = vpop.f32.mrf.mxu0
    %v656 = vadd.f32 0.0, %v655
    %657 = vmatmul.f32.gmra.mxu0 %v636
    %v658 = vpop.f32.mrf.mxu0
    %v659 = vadd.f32 0.0, %v658
    %660 = vdwg.mxu0
    %661 = vrot.lane.b32.xlu0 %v201, 48
    %v662 = vpop.permute.xlu0 %661
    %663 = vrot.lane.b32.xlu0 %v202, 48
    %v664 = vpop.permute.xlu0 %663
    %v668 = vsel %vm217, %v624, 0
    %v671 = vsel %vm217, %v625, 0
    %673 = vmatpush.msra.mxu0 0.0
    %674 = vmatpush.msra.mxu0 0.0
    %675 = vmatpush.msra.mxu0 0.0
    %676 = vmatpush.msra.mxu0 0.0
    %677 = vmatpush.msra.mxu0 0.0
    %678 = vmatpush.msra.mxu0 0.0
    %679 = vmatpush.msra.mxu0 0.0
    %680 = vmatpush.msra.mxu0 0.0
    %681 = vmatpush.msra.mxu0 0.0
    %682 = vmatpush.msra.mxu0 0.0
    %683 = vmatpush.msra.mxu0 0.0
    %684 = vmatpush.msra.mxu0 0.0
    %685 = vmatpush.msra.mxu0 0.0
    %686 = vmatpush.msra.mxu0 0.0
    %687 = vmatpush.msra.mxu0 %v664
    %688 = vmatpush.msra.mxu0 %v662
    %689 = vmatmul.f32.gmra.mxu0 %v668
    %v690 = vpop.f32.mrf.mxu0
    %v691 = vadd.f32 0.0, %v690
    %692 = vmatmul.f32.gmra.mxu0 %v671
    %v693 = vpop.f32.mrf.mxu0
    %v694 = vadd.f32 0.0, %v693
    %695 = vdwg.mxu0
    %698 = vrot.lane.b32.xlu0 %v28, 32
    %v699 = vpop.permute.xlu0 %698
    %700 = vrot.lane.b32.xlu0 %v30, 32
    %v701 = vpop.permute.xlu0 %700
    %v705 = vsel %vm217, %v656, 0
    %v708 = vsel %vm217, %v659, 0
    %v711 = vsel %vm217, %v691, 0
    %v714 = vsel %vm217, %v694, 0
    %716 = vmatpush.msra.mxu0 0.0
    %717 = vmatpush.msra.mxu0 0.0
    %718 = vmatpush.msra.mxu0 0.0
    %719 = vmatpush.msra.mxu0 0.0
    %720 = vmatpush.msra.mxu0 0.0
    %721 = vmatpush.msra.mxu0 0.0
    %722 = vmatpush.msra.mxu0 0.0
    %723 = vmatpush.msra.mxu0 0.0
    %724 = vmatpush.msra.mxu0 0.0
    %725 = vmatpush.msra.mxu0 0.0
    %726 = vmatpush.msra.mxu0 0.0
    %727 = vmatpush.msra.mxu0 0.0
    %728 = vmatpush.msra.mxu0 0.0
    %729 = vmatpush.msra.mxu0 0.0
    %730 = vmatpush.msra.mxu0 %v701
    %731 = vmatpush.msra.mxu0 %v699
    %732 = vmatmul.f32.gmra.mxu0 %v705
    %v733 = vpop.f32.mrf.mxu0
    %v734 = vadd.f32 0.0, %v733
    %735 = vmatmul.f32.gmra.mxu0 %v708
    %v736 = vpop.f32.mrf.mxu0
    %v737 = vadd.f32 0.0, %v736
    %738 = vmatmul.f32.gmra.mxu0 %v711
    %v739 = vpop.f32.mrf.mxu0
    %v740 = vadd.f32 0.0, %v739
    %741 = vmatmul.f32.gmra.mxu0 %v714
    %v742 = vpop.f32.mrf.mxu0
    %v743 = vadd.f32 0.0, %v742
    %744 = vdwg.mxu0
    %747 = vrot.lane.b32.xlu0 %v24, 32
    %v748 = vpop.permute.xlu0 %747
    %749 = vrot.lane.b32.xlu0 %v26, 32
    %v750 = vpop.permute.xlu0 %749
    %v754 = vsel %vm217, %v412, 0
    %v757 = vsel %vm217, %v415, 0
    %v760 = vsel %vm217, %v447, 0
    %v763 = vsel %vm217, %v450, 0
    %765 = vmatpush.msra.mxu0 0.0
    %766 = vmatpush.msra.mxu0 0.0
    %767 = vmatpush.msra.mxu0 0.0
    %768 = vmatpush.msra.mxu0 0.0
    %769 = vmatpush.msra.mxu0 0.0
    %770 = vmatpush.msra.mxu0 0.0
    %771 = vmatpush.msra.mxu0 0.0
    %772 = vmatpush.msra.mxu0 0.0
    %773 = vmatpush.msra.mxu0 0.0
    %774 = vmatpush.msra.mxu0 0.0
    %775 = vmatpush.msra.mxu0 0.0
    %776 = vmatpush.msra.mxu0 0.0
    %777 = vmatpush.msra.mxu0 0.0
    %778 = vmatpush.msra.mxu0 0.0
    %779 = vmatpush.msra.mxu0 %v750
    %780 = vmatpush.msra.mxu0 %v748
    %781 = vmatmul.f32.gmra.mxu0 %v754
    %v782 = vpop.f32.mrf.mxu0
    %v783 = vadd.f32 %v734, %v782
    %784 = vmatmul.f32.gmra.mxu0 %v757
    %v785 = vpop.f32.mrf.mxu0
    %v786 = vadd.f32 %v737, %v785
    %787 = vmatmul.f32.gmra.mxu0 %v760
    %v788 = vpop.f32.mrf.mxu0
    %v789 = vadd.f32 %v740, %v788
    %790 = vmatmul.f32.gmra.mxu0 %v763
    %v791 = vpop.f32.mrf.mxu0
    %v792 = vadd.f32 %v743, %v791
    %793 = vdwg.mxu0
    %v794 = vadd.f32 %v48, %v783
    %v795 = vadd.f32 %v49, %v786
    %v796 = vadd.f32 %v50, %v789
    %v797 = vadd.f32 %v51, %v792
    %v798 = vperm.slane %v21, 2
    %v799 = vadd.f32 %v794, %v798
    %v800 = vadd.f32 %v795, %v798
    %v801 = vadd.f32 %v796, %v798
    %v802 = vadd.f32 %v797, %v798
    %v803 = vsel %vm52, %v799, 0.0
    %804 = vadd.xlane.f32.xlu0 %v803
    %v805 = vpop.xlane.xlu0 %804
    %v806 = vsel %vm52, %v800, 0.0
    %807 = vadd.xlane.f32.xlu0 %v806
    %v808 = vpop.xlane.xlu0 %807
    %v809 = vsel %vm52, %v801, 0.0
    %810 = vadd.xlane.f32.xlu0 %v809
    %v811 = vpop.xlane.xlu0 %810
    %v812 = vsel %vm52, %v802, 0.0
    %813 = vadd.xlane.f32.xlu0 %v812
    %v814 = vpop.xlane.xlu0 %813
    %v815 = vmul.f32 %v805, %v71
    %v816 = vmul.f32 %v808, %v71
    %v817 = vmul.f32 %v811, %v71
    %v818 = vmul.f32 %v814, %v71
    %v819 = vsub.f32 %v799, %v815
    %v820 = vsub.f32 %v800, %v816
    %v821 = vsub.f32 %v801, %v817
    %v822 = vsub.f32 %v802, %v818
    %v823 = vmul.f32 %v819, %v819
    %v824 = vmul.f32 %v820, %v820
    %v825 = vmul.f32 %v821, %v821
    %v826 = vmul.f32 %v822, %v822
    %v827 = vsel %vm52, %v823, 0.0
    %828 = vadd.xlane.f32.xlu0 %v827
    %v829 = vpop.xlane.xlu0 %828
    %v830 = vsel %vm52, %v824, 0.0
    %831 = vadd.xlane.f32.xlu0 %v830
    %v832 = vpop.xlane.xlu0 %831
    %v833 = vsel %vm52, %v825, 0.0
    %834 = vadd.xlane.f32.xlu0 %v833
    %v835 = vpop.xlane.xlu0 %834
    %v836 = vsel %vm52, %v826, 0.0
    %837 = vadd.xlane.f32.xlu0 %v836
    %v838 = vpop.xlane.xlu0 %837
    %v839 = vmul.f32 %v829, %v71
    %v840 = vmul.f32 %v832, %v71
    %v841 = vmul.f32 %v835, %v71
    %v842 = vmul.f32 %v838, %v71
    %v843 = vadd.f32 %v839, 1e-05
    %v844 = vadd.f32 %v840, 1e-05
    %v845 = vadd.f32 %v841, 1e-05
    %v846 = vadd.f32 %v842, 1e-05
    %v847 = vrsqrt.pop %v843
    %v848 = vmul.f32 %v847, %v843
    %v849 = vmul.f32 %v848, %v847
    %v850 = vmul.f32 0.5, %v849
    %v851 = vsub.f32 1.5, %v850
    %v852 = vmul.f32 %v847, %v851
    %vm853 = vweird.f32 %v843
    %vm854 = vweird.f32 %v847
    %vm855 = vmor %vm853, %vm854
    %v856 = vsel %vm855, %v847, %v852
    %v857 = vrsqrt.pop %v844
    %v858 = vmul.f32 %v857, %v844
    %v859 = vmul.f32 %v858, %v857
    %v860 = vmul.f32 0.5, %v859
    %v861 = vsub.f32 1.5, %v860
    %v862 = vmul.f32 %v857, %v861
    %vm863 = vweird.f32 %v844
    %vm864 = vweird.f32 %v857
    %vm865 = vmor %vm863, %vm864
    %v866 = vsel %vm865, %v857, %v862
    %v867 = vrsqrt.pop %v845
    %v868 = vmul.f32 %v867, %v845
    %v869 = vmul.f32 %v868, %v867
    %v870 = vmul.f32 0.5, %v869
    %v871 = vsub.f32 1.5, %v870
    %v872 = vmul.f32 %v867, %v871
    %vm873 = vweird.f32 %v845
    %vm874 = vweird.f32 %v867
    %vm875 = vmor %vm873, %vm874
    %v876 = vsel %vm875, %v867, %v872
    %v877 = vrsqrt.pop %v846
    %v878 = vmul.f32 %v877, %v846
    %v879 = vmul.f32 %v878, %v877
    %v880 = vmul.f32 0.5, %v879
    %v881 = vsub.f32 1.5, %v880
    %v882 = vmul.f32 %v877, %v881
    %vm883 = vweird.f32 %v846
    %vm884 = vweird.f32 %v877
    %vm885 = vmor %vm883, %vm884
    %v886 = vsel %vm885, %v877, %v882
    %v887 = vmul.f32 %v819, %v856
    %v888 = vmul.f32 %v820, %v866
    %v889 = vmul.f32 %v821, %v876
    %v890 = vmul.f32 %v822, %v886
    %v891 = vperm.slane %v21, 3
    %v892 = vmul.f32 %v887, %v891
    %v893 = vmul.f32 %v888, %v891
    %v894 = vmul.f32 %v889, %v891
    %v895 = vmul.f32 %v890, %v891
    %v896 = vperm.slane %v21, 4
    %v897 = vadd.f32 %v892, %v896
    %v898 = vadd.f32 %v893, %v896
    %v899 = vadd.f32 %v894, %v896
    %v900 = vadd.f32 %v895, %v896
    %v901 = vperm.slane %v21, 6
    %v903 = vsel %vm52, %v897, 0
    %v906 = vsel %vm52, %v898, 0
    %v909 = vsel %vm52, %v899, 0
    %v912 = vsel %vm52, %v900, 0
    %914 = vmatpush.msra.mxu0 0.0
    %915 = vmatpush.msra.mxu0 0.0
    %916 = vmatpush.msra.mxu0 0.0
    %917 = vmatpush.msra.mxu0 0.0
    %918 = vmatpush.msra.mxu0 0.0
    %919 = vmatpush.msra.mxu0 0.0
    %920 = vmatpush.msra.mxu0 0.0
    %921 = vmatpush.msra.mxu0 0.0
    %922 = vmatpush.msra.mxu0 0.0
    %923 = vmatpush.msra.mxu0 0.0
    %924 = vmatpush.msra.mxu0 0.0
    %925 = vmatpush.msra.mxu0 0.0
    %926 = vmatpush.msra.mxu0 %v31
    %927 = vmatpush.msra.mxu0 %v29
    %928 = vmatpush.msra.mxu0 %v27
    %929 = vmatpush.msra.mxu0 %v25
    %930 = vmatmul.f32.gmra.mxu0 %v903
    %v931 = vpop.f32.mrf.mxu0
    %v932 = vadd.f32 %v901, %v931
    %933 = vmatmul.f32.gmra.mxu0 %v906
    %v934 = vpop.f32.mrf.mxu0
    %v935 = vadd.f32 %v901, %v934
    %936 = vmatmul.f32.gmra.mxu0 %v909
    %v937 = vpop.f32.mrf.mxu0
    %v938 = vadd.f32 %v901, %v937
    %939 = vmatmul.f32.gmra.mxu0 %v912
    %v940 = vpop.f32.mrf.mxu0
    %v941 = vadd.f32 %v901, %v940
    %942 = vdwg.mxu0
    %v943 = vmax.f32 %v932, 0.0
    %v944 = vmax.f32 %v935, 0.0
    %v945 = vmax.f32 %v938, 0.0
    %v946 = vmax.f32 %v941, 0.0
    %v947 = vperm.slane %v21, 5
    %948 = vmatpush.msra.mxu0 %v47
    %949 = vmatpush.msra.mxu0 %v46
    %950 = vmatpush.msra.mxu0 %v45
    %951 = vmatpush.msra.mxu0 %v44
    %952 = vmatpush.msra.mxu0 %v43
    %953 = vmatpush.msra.mxu0 %v42
    %954 = vmatpush.msra.mxu0 %v41
    %955 = vmatpush.msra.mxu0 %v40
    %956 = vmatpush.msra.mxu0 %v39
    %957 = vmatpush.msra.mxu0 %v38
    %958 = vmatpush.msra.mxu0 %v37
    %959 = vmatpush.msra.mxu0 %v36
    %960 = vmatpush.msra.mxu0 %v35
    %961 = vmatpush.msra.mxu0 %v34
    %962 = vmatpush.msra.mxu0 %v33
    %963 = vmatpush.msra.mxu0 %v32
    %964 = vmatmul.f32.gmra.mxu0 %v943
    %v965 = vpop.f32.mrf.mxu0
    %v966 = vadd.f32 %v947, %v965
    %967 = vmatmul.f32.gmra.mxu0 %v944
    %v968 = vpop.f32.mrf.mxu0
    %v969 = vadd.f32 %v947, %v968
    %970 = vmatmul.f32.gmra.mxu0 %v945
    %v971 = vpop.f32.mrf.mxu0
    %v972 = vadd.f32 %v947, %v971
    %973 = vmatmul.f32.gmra.mxu0 %v946
    %v974 = vpop.f32.mrf.mxu0
    %v975 = vadd.f32 %v947, %v974
    %976 = vdwg.mxu0
    %v977 = vadd.f32 %v799, %v966
    %v978 = vadd.f32 %v800, %v969
    %v979 = vadd.f32 %v801, %v972
    %v980 = vadd.f32 %v802, %v975
    %981 = vst.msk [vmem:[#allocation2] sm:$0xff] %vm52, %v977
    %982 = vst.msk [vmem:[#allocation2 + $0x8] sm:$0xff] %vm52, %v978
    %983 = vst.msk [vmem:[#allocation2 + $0x10] sm:$0xff] %vm52, %v979
    %984 = vst.msk [vmem:[#allocation2 + $0x18] sm:$0xff] %vm52, %v980
    // Predicated region
    $region22: #{tpu_custom_call.1} parent=1 // pred_check
      _
    $region23: #{tpu_custom_call.1} parent=1 // pred_check_branch
      %986 = sbr.rel (0) target = $region25
    $region24: #{tpu_custom_call.1} parent=1 // pred_region
      %988 = vsyncadd [#allocation3], 0
      %s989 = sshll.u32 [#allocation2], 4
      %s990 = int_to_ptr.vmem [resolvable:$true] %s989
      %s991 = sshll.u32 %s5, 4
      %s992 = int_to_ptr.hbm [resolvable:$true] %s991
      %997 = dma.vmem_to_hbm [thread:$0]  %s990, 512, %s992, [#allocation3], 128, 128, 8
    $region25: #{tpu_custom_call.1} parent=1 // pred_fallthru
      _
    // Predicated region
    $region26: #{tpu_custom_call.1} parent=1 // pred_check
      _
    $region27: #{tpu_custom_call.1} parent=1 // pred_check_branch
      %999 = sbr.rel (0) target = $region29
    $region28: #{tpu_custom_call.1} parent=1 // pred_region
      %1001 = dma.done [#allocation3], 512
    $region29: #{tpu_custom_call.1} parent=1 // pred_fallthru
      _
    %1002 = vsyncpa [#allocation3], 1

</llo_original>
